<compile_context>
chip_gen: v7x
topology: tpu7x:2x2x1
jax: 0.10.0
libtpu: 0.0.40
codegen_flags: <defaults>
</compile_context>

<pallas_src>
import functools

import jax
import jax.numpy as jnp
from jax import lax
from jax.experimental import pallas as pl
from jax.experimental.pallas import tpu as pltpu


def _depth_to_space_kernel(x_ref, o_ref, *, bs, c_out):
    """One (batch, H-tile) step: (C, th, W) -> (c_out, th*bs, W*bs), DCR ordering."""
    _, _, th, W = x_ref.shape
    Wo = W * bs

    x = x_ref[0]                                   # (C, th, W), native dtype

    # 0/1 lane-scatter matrices S_j[w, q] = (q == w*bs + j); built once per step
    # (hoisted out of the phase loops), in the input dtype so the matmul is exact
    # (each output element picks exactly one input value).
    w_idx = lax.broadcasted_iota(jnp.int32, (W, Wo), 0)
    q_idx = lax.broadcasted_iota(jnp.int32, (W, Wo), 1)
    s_mats = [(q_idx == w_idx * bs + j).astype(x.dtype) for j in range(bs)]

    # Fold (c_out, th) into the matmul M dimension when that reshape is a layout no-op
    # (th must be a multiple of the native sublane tile for this dtype).
    itemsize = jnp.dtype(x.dtype).itemsize
    packing = max(1, 4 // itemsize)
    fold = (th % (8 * packing) == 0)

    for i in range(bs):                            # row phase (static)
        acc = None
        for j in range(bs):                        # column phase (static)
            lo = (i * bs + j) * c_out
            slab = x[lo:lo + c_out]                # (c_out, th, W)
            if fold:
                part = jnp.dot(slab.reshape(c_out * th, W), s_mats[j],
                               preferred_element_type=jnp.float32)
            else:
                part = jnp.einsum('chw,wq->chq', slab, s_mats[j],
                                  preferred_element_type=jnp.float32)
            acc = part if acc is None else acc + part
        row = acc.reshape(c_out, th, Wo).astype(o_ref.dtype)   # (c_out, th, W*bs)

        # Row phases land in disjoint output rows -> write them directly into the
        # output tile; no accumulator across phases, all indices static.
        for h in range(th):
            o_ref[0, :, h * bs + i, :] = row[:, h, :]


def _pick_h_tile(H, C, W, itemsize, target_bytes=1 << 20):
    """Largest H tile (multiple of 8 dividing H, or full H) with input block <= target."""
    if H % 8 != 0 or C * H * W * itemsize <= target_bytes:
        return H
    best = 8
    for th in range(8, H, 8):
        if H % th == 0 and C * th * W * itemsize <= target_bytes:
            best = th
    return best


def depth_to_space(x, block_size):
    """Pallas TPU DepthToSpace, NCHW layout, DCR ordering (matches the nn.Module).

    Exact for floating dtypes (f32/bf16).
    # TODO(synk): integer dtypes route through the MXU f32 accumulator (exact only
    # up to 2**24); add a pure-copy path for ints if needed.
    """
    N, C, H, W = x.shape
    bs = block_size
    if C % (bs * bs) != 0:
        raise ValueError("C must be divisible by block_size**2")
    c_out = C // (bs * bs)

    th = _pick_h_tile(H, C, W, jnp.dtype(x.dtype).itemsize)
    grid = (N, H // th)

    kernel = functools.partial(_depth_to_space_kernel, bs=bs, c_out=c_out)
    return pl.pallas_call(
        kernel,
        out_shape=jax.ShapeDtypeStruct((N, c_out, H * bs, W * bs), x.dtype),
        grid=grid,
        in_specs=[pl.BlockSpec((1, C, th, W), lambda n, t: (n, 0, t, 0))],
        out_specs=pl.BlockSpec((1, c_out, th * bs, W * bs),
                               lambda n, t: (n, 0, t, 0)),
        compiler_params=pltpu.CompilerParams(
            dimension_semantics=("parallel", "parallel"),
            vmem_limit_bytes=32 * 1024 * 1024),
    )(x)


def _reference(x, bs):
    # Pure-JAX transcription of the PyTorch forward (view/permute/view).
    N, C, H, W = x.shape
    c_out = C // (bs * bs)
    t = x.reshape(N, bs, bs, c_out, H, W)
    t = jnp.transpose(t, (0, 3, 4, 1, 5, 2))
    return t.reshape(N, c_out, H * bs, W * bs)


if __name__ == "__main__":
    key = jax.random.PRNGKey(0)
    k1, k2, k3 = jax.random.split(key, 3)
    bs = 2

    # Primary test: N=2, C=4, H=W=16  ->  out (2, 1, 32, 32)
    x = jax.random.normal(k1, (2, 4, 16, 16), dtype=jnp.float32)
    out = jax.block_until_ready(depth_to_space(x, bs))
    ref = _reference(x, bs)
    assert out.shape == ref.shape and out.dtype == ref.dtype
    assert jnp.allclose(out, ref), "Pallas DepthToSpace mismatch vs reference (f32)"

    # Multiple output channels: C=8 -> c_out=2
    x2 = jax.random.normal(k2, (2, 8, 16, 16), dtype=jnp.float32)
    out2 = jax.block_until_ready(depth_to_space(x2, bs))
    assert jnp.allclose(out2, _reference(x2, bs)), "mismatch (C=8 case)"

    # Native-dtype path: bf16 in / bf16 out, no f32 round-trip of the data.
    x3 = jax.random.normal(k3, (2, 8, 16, 16), dtype=jnp.bfloat16)
    out3 = jax.block_until_ready(depth_to_space(x3, bs))
    ref3 = _reference(x3, bs)
    assert out3.dtype == ref3.dtype
    assert jnp.allclose(out3.astype(jnp.float32), ref3.astype(jnp.float32)), \
        "mismatch (bf16 case)"

    print("KERNEL_OK")
</pallas_src>

<mosaic_0001>
module attributes {stable_mosaic.version = 11 : i64} {
  func.func @_depth_to_space_kernel(%arg0: i32, %arg1: i32, %arg2: memref<1x4x16x16xf32, #tpu.memory_space<vmem>>, %arg3: memref<1x1x32x32xf32, #tpu.memory_space<vmem>>) attributes {dimension_semantics = [#tpu.dimension_semantics<parallel>, #tpu.dimension_semantics<parallel>], iteration_bounds = array<i64: 2, 1>, scalar_prefetch = 0 : i64, scratch_operands = 0 : i64, tpu.core_type = #tpu.core_type<tc>, window_params = [{transform_indices = @transform_0, window_bounds = array<i64: 1, 4, 16, 16>}, {transform_indices = @transform_1, window_bounds = array<i64: 1, 1, 32, 32>}]} {
    %c0 = arith.constant 0 : index
    %c0_0 = arith.constant 0 : index
    %c0_1 = arith.constant 0 : index
    %c0_2 = arith.constant 0 : index
    %0 = vector.load %arg2[%c0, %c0_0, %c0_1, %c0_2] : memref<1x4x16x16xf32, #tpu.memory_space<vmem>>, vector<1x4x16x16xf32>
    %1 = vector.shape_cast %0 : vector<1x4x16x16xf32> to vector<4x16x16xf32>
    %2 = tpu.iota {dimensions = array<i32: 0>} : vector<16x32xi32>
    %3 = tpu.iota {dimensions = array<i32: 1>} : vector<16x32xi32>
    %c2_i32 = arith.constant 2 : i32
    %4 = vector.broadcast %c2_i32 : i32 to vector<16x32xi32>
    %5 = arith.muli %2, %4 : vector<16x32xi32>
    %c0_i32 = arith.constant 0 : i32
    %6 = vector.broadcast %c0_i32 : i32 to vector<16x32xi32>
    %7 = arith.addi %5, %6 : vector<16x32xi32>
    %8 = arith.cmpi eq, %3, %7 : vector<16x32xi32>
    %9 = arith.extui %8 : vector<16x32xi1> to vector<16x32xi32>
    %10 = arith.sitofp %9 : vector<16x32xi32> to vector<16x32xf32>
    %c2_i32_3 = arith.constant 2 : i32
    %11 = vector.broadcast %c2_i32_3 : i32 to vector<16x32xi32>
    %12 = arith.muli %2, %11 : vector<16x32xi32>
    %c1_i32 = arith.constant 1 : i32
    %13 = vector.broadcast %c1_i32 : i32 to vector<16x32xi32>
    %14 = arith.addi %12, %13 : vector<16x32xi32>
    %15 = arith.cmpi eq, %3, %14 : vector<16x32xi32>
    %16 = arith.extui %15 : vector<16x32xi1> to vector<16x32xi32>
    %17 = arith.sitofp %16 : vector<16x32xi32> to vector<16x32xf32>
    %18 = vector.extract_strided_slice %1 {offsets = [0, 0, 0], sizes = [1, 16, 16], strides = [1, 1, 1]} : vector<4x16x16xf32> to vector<1x16x16xf32>
    %19 = vector.shape_cast %18 : vector<1x16x16xf32> to vector<16x16xf32>
    %cst = arith.constant dense<0.000000e+00> : vector<16x32xf32>
    %20 = tpu.matmul %19, %10, %cst {dimension_numbers = #tpu.dot_dimension_numbers<[1], [0], [0], [1], [0, 0, 1, 1], [], []>} : vector<16x16xf32>, vector<16x32xf32>, vector<16x32xf32> -> vector<16x32xf32>
    %21 = vector.extract_strided_slice %1 {offsets = [1, 0, 0], sizes = [1, 16, 16], strides = [1, 1, 1]} : vector<4x16x16xf32> to vector<1x16x16xf32>
    %22 = vector.shape_cast %21 : vector<1x16x16xf32> to vector<16x16xf32>
    %cst_4 = arith.constant dense<0.000000e+00> : vector<16x32xf32>
    %23 = tpu.matmul %22, %17, %cst_4 {dimension_numbers = #tpu.dot_dimension_numbers<[1], [0], [0], [1], [0, 0, 1, 1], [], []>} : vector<16x16xf32>, vector<16x32xf32>, vector<16x32xf32> -> vector<16x32xf32>
    %24 = arith.addf %20, %23 : vector<16x32xf32>
    %25 = vector.shape_cast %24 : vector<16x32xf32> to vector<1x16x32xf32>
    %26 = vector.extract_strided_slice %25 {offsets = [0, 0, 0], sizes = [1, 1, 32], strides = [1, 1, 1]} : vector<1x16x32xf32> to vector<1x1x32xf32>
    %27 = vector.shape_cast %26 : vector<1x1x32xf32> to vector<1x32xf32>
    %c0_5 = arith.constant 0 : index
    %c0_6 = arith.constant 0 : index
    %c0_7 = arith.constant 0 : index
    %c0_8 = arith.constant 0 : index
    %28 = vector.load %arg3[%c0_5, %c0_6, %c0_7, %c0_8] : memref<1x1x32x32xf32, #tpu.memory_space<vmem>>, vector<1x1x1x32xf32>
    %29 = vector.shape_cast %28 : vector<1x1x1x32xf32> to vector<1x32xf32>
    %30 = vector.shape_cast %27 : vector<1x32xf32> to vector<1x1x1x32xf32>
    tpu.vector_store %arg3[%c0_5, %c0_6, %c0_7, %c0_8], %30 {strides = array<i32>} : memref<1x1x32x32xf32, #tpu.memory_space<vmem>>, vector<1x1x1x32xf32>,
    %31 = vector.extract_strided_slice %25 {offsets = [0, 1, 0], sizes = [1, 1, 32], strides = [1, 1, 1]} : vector<1x16x32xf32> to vector<1x1x32xf32>
    %32 = vector.shape_cast %31 : vector<1x1x32xf32> to vector<1x32xf32>
    %c0_9 = arith.constant 0 : index
    %c0_10 = arith.constant 0 : index
    %c2 = arith.constant 2 : index
    %c0_11 = arith.constant 0 : index
    %33 = vector.load %arg3[%c0_9, %c0_10, %c2, %c0_11] : memref<1x1x32x32xf32, #tpu.memory_space<vmem>>, vector<1x1x1x32xf32>
    %34 = vector.shape_cast %33 : vector<1x1x1x32xf32> to vector<1x32xf32>
    %35 = vector.shape_cast %32 : vector<1x32xf32> to vector<1x1x1x32xf32>
    tpu.vector_store %arg3[%c0_9, %c0_10, %c2, %c0_11], %35 {strides = array<i32>} : memref<1x1x32x32xf32, #tpu.memory_space<vmem>>, vector<1x1x1x32xf32>,
    %36 = vector.extract_strided_slice %25 {offsets = [0, 2, 0], sizes = [1, 1, 32], strides = [1, 1, 1]} : vector<1x16x32xf32> to vector<1x1x32xf32>
    %37 = vector.shape_cast %36 : vector<1x1x32xf32> to vector<1x32xf32>
    %c0_12 = arith.constant 0 : index
    %c0_13 = arith.constant 0 : index
    %c4 = arith.constant 4 : index
    %c0_14 = arith.constant 0 : index
    %38 = vector.load %arg3[%c0_12, %c0_13, %c4, %c0_14] : memref<1x1x32x32xf32, #tpu.memory_space<vmem>>, vector<1x1x1x32xf32>
    %39 = vector.shape_cast %38 : vector<1x1x1x32xf32> to vector<1x32xf32>
    %40 = vector.shape_cast %37 : vector<1x32xf32> to vector<1x1x1x32xf32>
    tpu.vector_store %arg3[%c0_12, %c0_13, %c4, %c0_14], %40 {strides = array<i32>} : memref<1x1x32x32xf32, #tpu.memory_space<vmem>>, vector<1x1x1x32xf32>,
    %41 = vector.extract_strided_slice %25 {offsets = [0, 3, 0], sizes = [1, 1, 32], strides = [1, 1, 1]} : vector<1x16x32xf32> to vector<1x1x32xf32>
    %42 = vector.shape_cast %41 : vector<1x1x32xf32> to vector<1x32xf32>
    %c0_15 = arith.constant 0 : index
    %c0_16 = arith.constant 0 : index
    %c6 = arith.constant 6 : index
    %c0_17 = arith.constant 0 : index
    %43 = vector.load %arg3[%c0_15, %c0_16, %c6, %c0_17] : memref<1x1x32x32xf32, #tpu.memory_space<vmem>>, vector<1x1x1x32xf32>
    %44 = vector.shape_cast %43 : vector<1x1x1x32xf32> to vector<1x32xf32>
    %45 = vector.shape_cast %42 : vector<1x32xf32> to vector<1x1x1x32xf32>
    tpu.vector_store %arg3[%c0_15, %c0_16, %c6, %c0_17], %45 {strides = array<i32>} : memref<1x1x32x32xf32, #tpu.memory_space<vmem>>, vector<1x1x1x32xf32>,
    %46 = vector.extract_strided_slice %25 {offsets = [0, 4, 0], sizes = [1, 1, 32], strides = [1, 1, 1]} : vector<1x16x32xf32> to vector<1x1x32xf32>
    %47 = vector.shape_cast %46 : vector<1x1x32xf32> to vector<1x32xf32>
    %c0_18 = arith.constant 0 : index
    %c0_19 = arith.constant 0 : index
    %c8 = arith.constant 8 : index
    %c0_20 = arith.constant 0 : index
    %48 = vector.load %arg3[%c0_18, %c0_19, %c8, %c0_20] : memref<1x1x32x32xf32, #tpu.memory_space<vmem>>, vector<1x1x1x32xf32>
    %49 = vector.shape_cast %48 : vector<1x1x1x32xf32> to vector<1x32xf32>
    %50 = vector.shape_cast %47 : vector<1x32xf32> to vector<1x1x1x32xf32>
    tpu.vector_store %arg3[%c0_18, %c0_19, %c8, %c0_20], %50 {strides = array<i32>} : memref<1x1x32x32xf32, #tpu.memory_space<vmem>>, vector<1x1x1x32xf32>,
    %51 = vector.extract_strided_slice %25 {offsets = [0, 5, 0], sizes = [1, 1, 32], strides = [1, 1, 1]} : vector<1x16x32xf32> to vector<1x1x32xf32>
    %52 = vector.shape_cast %51 : vector<1x1x32xf32> to vector<1x32xf32>
    %c0_21 = arith.constant 0 : index
    %c0_22 = arith.constant 0 : index
    %c10 = arith.constant 10 : index
    %c0_23 = arith.constant 0 : index
    %53 = vector.load %arg3[%c0_21, %c0_22, %c10, %c0_23] : memref<1x1x32x32xf32, #tpu.memory_space<vmem>>, vector<1x1x1x32xf32>
    %54 = vector.shape_cast %53 : vector<1x1x1x32xf32> to vector<1x32xf32>
    %55 = vector.shape_cast %52 : vector<1x32xf32> to vector<1x1x1x32xf32>
    tpu.vector_store %arg3[%c0_21, %c0_22, %c10, %c0_23], %55 {strides = array<i32>} : memref<1x1x32x32xf32, #tpu.memory_space<vmem>>, vector<1x1x1x32xf32>,
    %56 = vector.extract_strided_slice %25 {offsets = [0, 6, 0], sizes = [1, 1, 32], strides = [1, 1, 1]} : vector<1x16x32xf32> to vector<1x1x32xf32>
    %57 = vector.shape_cast %56 : vector<1x1x32xf32> to vector<1x32xf32>
    %c0_24 = arith.constant 0 : index
    %c0_25 = arith.constant 0 : index
    %c12 = arith.constant 12 : index
    %c0_26 = arith.constant 0 : index
    %58 = vector.load %arg3[%c0_24, %c0_25, %c12, %c0_26] : memref<1x1x32x32xf32, #tpu.memory_space<vmem>>, vector<1x1x1x32xf32>
    %59 = vector.shape_cast %58 : vector<1x1x1x32xf32> to vector<1x32xf32>
    %60 = vector.shape_cast %57 : vector<1x32xf32> to vector<1x1x1x32xf32>
    tpu.vector_store %arg3[%c0_24, %c0_25, %c12, %c0_26], %60 {strides = array<i32>} : memref<1x1x32x32xf32, #tpu.memory_space<vmem>>, vector<1x1x1x32xf32>,
    %61 = vector.extract_strided_slice %25 {offsets = [0, 7, 0], sizes = [1, 1, 32], strides = [1, 1, 1]} : vector<1x16x32xf32> to vector<1x1x32xf32>
    %62 = vector.shape_cast %61 : vector<1x1x32xf32> to vector<1x32xf32>
    %c0_27 = arith.constant 0 : index
    %c0_28 = arith.constant 0 : index
    %c14 = arith.constant 14 : index
    %c0_29 = arith.constant 0 : index
    %63 = vector.load %arg3[%c0_27, %c0_28, %c14, %c0_29] : memref<1x1x32x32xf32, #tpu.memory_space<vmem>>, vector<1x1x1x32xf32>
    %64 = vector.shape_cast %63 : vector<1x1x1x32xf32> to vector<1x32xf32>
    %65 = vector.shape_cast %62 : vector<1x32xf32> to vector<1x1x1x32xf32>
    tpu.vector_store %arg3[%c0_27, %c0_28, %c14, %c0_29], %65 {strides = array<i32>} : memref<1x1x32x32xf32, #tpu.memory_space<vmem>>, vector<1x1x1x32xf32>,
    %66 = vector.extract_strided_slice %25 {offsets = [0, 8, 0], sizes = [1, 1, 32], strides = [1, 1, 1]} : vector<1x16x32xf32> to vector<1x1x32xf32>
    %67 = vector.shape_cast %66 : vector<1x1x32xf32> to vector<1x32xf32>
    %c0_30 = arith.constant 0 : index
    %c0_31 = arith.constant 0 : index
    %c16 = arith.constant 16 : index
    %c0_32 = arith.constant 0 : index
    %68 = vector.load %arg3[%c0_30, %c0_31, %c16, %c0_32] : memref<1x1x32x32xf32, #tpu.memory_space<vmem>>, vector<1x1x1x32xf32>
    %69 = vector.shape_cast %68 : vector<1x1x1x32xf32> to vector<1x32xf32>
    %70 = vector.shape_cast %67 : vector<1x32xf32> to vector<1x1x1x32xf32>
    tpu.vector_store %arg3[%c0_30, %c0_31, %c16, %c0_32], %70 {strides = array<i32>} : memref<1x1x32x32xf32, #tpu.memory_space<vmem>>, vector<1x1x1x32xf32>,
    %71 = vector.extract_strided_slice %25 {offsets = [0, 9, 0], sizes = [1, 1, 32], strides = [1, 1, 1]} : vector<1x16x32xf32> to vector<1x1x32xf32>
    %72 = vector.shape_cast %71 : vector<1x1x32xf32> to vector<1x32xf32>
    %c0_33 = arith.constant 0 : index
    %c0_34 = arith.constant 0 : index
    %c18 = arith.constant 18 : index
    %c0_35 = arith.constant 0 : index
    %73 = vector.load %arg3[%c0_33, %c0_34, %c18, %c0_35] : memref<1x1x32x32xf32, #tpu.memory_space<vmem>>, vector<1x1x1x32xf32>
    %74 = vector.shape_cast %73 : vector<1x1x1x32xf32> to vector<1x32xf32>
    %75 = vector.shape_cast %72 : vector<1x32xf32> to vector<1x1x1x32xf32>
    tpu.vector_store %arg3[%c0_33, %c0_34, %c18, %c0_35], %75 {strides = array<i32>} : memref<1x1x32x32xf32, #tpu.memory_space<vmem>>, vector<1x1x1x32xf32>,
    %76 = vector.extract_strided_slice %25 {offsets = [0, 10, 0], sizes = [1, 1, 32], strides = [1, 1, 1]} : vector<1x16x32xf32> to vector<1x1x32xf32>
    %77 = vector.shape_cast %76 : vector<1x1x32xf32> to vector<1x32xf32>
    %c0_36 = arith.constant 0 : index
    %c0_37 = arith.constant 0 : index
    %c20 = arith.constant 20 : index
    %c0_38 = arith.constant 0 : index
    %78 = vector.load %arg3[%c0_36, %c0_37, %c20, %c0_38] : memref<1x1x32x32xf32, #tpu.memory_space<vmem>>, vector<1x1x1x32xf32>
    %79 = vector.shape_cast %78 : vector<1x1x1x32xf32> to vector<1x32xf32>
    %80 = vector.shape_cast %77 : vector<1x32xf32> to vector<1x1x1x32xf32>
    tpu.vector_store %arg3[%c0_36, %c0_37, %c20, %c0_38], %80 {strides = array<i32>} : memref<1x1x32x32xf32, #tpu.memory_space<vmem>>, vector<1x1x1x32xf32>,
    %81 = vector.extract_strided_slice %25 {offsets = [0, 11, 0], sizes = [1, 1, 32], strides = [1, 1, 1]} : vector<1x16x32xf32> to vector<1x1x32xf32>
    %82 = vector.shape_cast %81 : vector<1x1x32xf32> to vector<1x32xf32>
    %c0_39 = arith.constant 0 : index
    %c0_40 = arith.constant 0 : index
    %c22 = arith.constant 22 : index
    %c0_41 = arith.constant 0 : index
    %83 = vector.load %arg3[%c0_39, %c0_40, %c22, %c0_41] : memref<1x1x32x32xf32, #tpu.memory_space<vmem>>, vector<1x1x1x32xf32>
    %84 = vector.shape_cast %83 : vector<1x1x1x32xf32> to vector<1x32xf32>
    %85 = vector.shape_cast %82 : vector<1x32xf32> to vector<1x1x1x32xf32>
    tpu.vector_store %arg3[%c0_39, %c0_40, %c22, %c0_41], %85 {strides = array<i32>} : memref<1x1x32x32xf32, #tpu.memory_space<vmem>>, vector<1x1x1x32xf32>,
    %86 = vector.extract_strided_slice %25 {offsets = [0, 12, 0], sizes = [1, 1, 32], strides = [1, 1, 1]} : vector<1x16x32xf32> to vector<1x1x32xf32>
    %87 = vector.shape_cast %86 : vector<1x1x32xf32> to vector<1x32xf32>
    %c0_42 = arith.constant 0 : index
    %c0_43 = arith.constant 0 : index
    %c24 = arith.constant 24 : index
    %c0_44 = arith.constant 0 : index
    %88 = vector.load %arg3[%c0_42, %c0_43, %c24, %c0_44] : memref<1x1x32x32xf32, #tpu.memory_space<vmem>>, vector<1x1x1x32xf32>
    %89 = vector.shape_cast %88 : vector<1x1x1x32xf32> to vector<1x32xf32>
    %90 = vector.shape_cast %87 : vector<1x32xf32> to vector<1x1x1x32xf32>
    tpu.vector_store %arg3[%c0_42, %c0_43, %c24, %c0_44], %90 {strides = array<i32>} : memref<1x1x32x32xf32, #tpu.memory_space<vmem>>, vector<1x1x1x32xf32>,
    %91 = vector.extract_strided_slice %25 {offsets = [0, 13, 0], sizes = [1, 1, 32], strides = [1, 1, 1]} : vector<1x16x32xf32> to vector<1x1x32xf32>
    %92 = vector.shape_cast %91 : vector<1x1x32xf32> to vector<1x32xf32>
    %c0_45 = arith.constant 0 : index
    %c0_46 = arith.constant 0 : index
    %c26 = arith.constant 26 : index
    %c0_47 = arith.constant 0 : index
    %93 = vector.load %arg3[%c0_45, %c0_46, %c26, %c0_47] : memref<1x1x32x32xf32, #tpu.memory_space<vmem>>, vector<1x1x1x32xf32>
    %94 = vector.shape_cast %93 : vector<1x1x1x32xf32> to vector<1x32xf32>
    %95 = vector.shape_cast %92 : vector<1x32xf32> to vector<1x1x1x32xf32>
    tpu.vector_store %arg3[%c0_45, %c0_46, %c26, %c0_47], %95 {strides = array<i32>} : memref<1x1x32x32xf32, #tpu.memory_space<vmem>>, vector<1x1x1x32xf32>,
    %96 = vector.extract_strided_slice %25 {offsets = [0, 14, 0], sizes = [1, 1, 32], strides = [1, 1, 1]} : vector<1x16x32xf32> to vector<1x1x32xf32>
    %97 = vector.shape_cast %96 : vector<1x1x32xf32> to vector<1x32xf32>
    %c0_48 = arith.constant 0 : index
    %c0_49 = arith.constant 0 : index
    %c28 = arith.constant 28 : index
    %c0_50 = arith.constant 0 : index
    %98 = vector.load %arg3[%c0_48, %c0_49, %c28, %c0_50] : memref<1x1x32x32xf32, #tpu.memory_space<vmem>>, vector<1x1x1x32xf32>
    %99 = vector.shape_cast %98 : vector<1x1x1x32xf32> to vector<1x32xf32>
    %100 = vector.shape_cast %97 : vector<1x32xf32> to vector<1x1x1x32xf32>
    tpu.vector_store %arg3[%c0_48, %c0_49, %c28, %c0_50], %100 {strides = array<i32>} : memref<1x1x32x32xf32, #tpu.memory_space<vmem>>, vector<1x1x1x32xf32>,
    %101 = vector.extract_strided_slice %25 {offsets = [0, 15, 0], sizes = [1, 1, 32], strides = [1, 1, 1]} : vector<1x16x32xf32> to vector<1x1x32xf32>
    %102 = vector.shape_cast %101 : vector<1x1x32xf32> to vector<1x32xf32>
    %c0_51 = arith.constant 0 : index
    %c0_52 = arith.constant 0 : index
    %c30 = arith.constant 30 : index
    %c0_53 = arith.constant 0 : index
    %103 = vector.load %arg3[%c0_51, %c0_52, %c30, %c0_53] : memref<1x1x32x32xf32, #tpu.memory_space<vmem>>, vector<1x1x1x32xf32>
    %104 = vector.shape_cast %103 : vector<1x1x1x32xf32> to vector<1x32xf32>
    %105 = vector.shape_cast %102 : vector<1x32xf32> to vector<1x1x1x32xf32>
    tpu.vector_store %arg3[%c0_51, %c0_52, %c30, %c0_53], %105 {strides = array<i32>} : memref<1x1x32x32xf32, #tpu.memory_space<vmem>>, vector<1x1x1x32xf32>,
    %106 = vector.extract_strided_slice %1 {offsets = [2, 0, 0], sizes = [1, 16, 16], strides = [1, 1, 1]} : vector<4x16x16xf32> to vector<1x16x16xf32>
    %107 = vector.shape_cast %106 : vector<1x16x16xf32> to vector<16x16xf32>
    %cst_54 = arith.constant dense<0.000000e+00> : vector<16x32xf32>
    %108 = tpu.matmul %107, %10, %cst_54 {dimension_numbers = #tpu.dot_dimension_numbers<[1], [0], [0], [1], [0, 0, 1, 1], [], []>} : vector<16x16xf32>, vector<16x32xf32>, vector<16x32xf32> -> vector<16x32xf32>
    %109 = vector.extract_strided_slice %1 {offsets = [3, 0, 0], sizes = [1, 16, 16], strides = [1, 1, 1]} : vector<4x16x16xf32> to vector<1x16x16xf32>
    %110 = vector.shape_cast %109 : vector<1x16x16xf32> to vector<16x16xf32>
    %cst_55 = arith.constant dense<0.000000e+00> : vector<16x32xf32>
    %111 = tpu.matmul %110, %17, %cst_55 {dimension_numbers = #tpu.dot_dimension_numbers<[1], [0], [0], [1], [0, 0, 1, 1], [], []>} : vector<16x16xf32>, vector<16x32xf32>, vector<16x32xf32> -> vector<16x32xf32>
    %112 = arith.addf %108, %111 : vector<16x32xf32>
    %113 = vector.shape_cast %112 : vector<16x32xf32> to vector<1x16x32xf32>
    %114 = vector.extract_strided_slice %113 {offsets = [0, 0, 0], sizes = [1, 1, 32], strides = [1, 1, 1]} : vector<1x16x32xf32> to vector<1x1x32xf32>
    %115 = vector.shape_cast %114 : vector<1x1x32xf32> to vector<1x32xf32>
    %c0_56 = arith.constant 0 : index
    %c0_57 = arith.constant 0 : index
    %c1 = arith.constant 1 : index
    %c0_58 = arith.constant 0 : index
    %116 = vector.load %arg3[%c0_56, %c0_57, %c1, %c0_58] : memref<1x1x32x32xf32, #tpu.memory_space<vmem>>, vector<1x1x1x32xf32>
    %117 = vector.shape_cast %116 : vector<1x1x1x32xf32> to vector<1x32xf32>
    %118 = vector.shape_cast %115 : vector<1x32xf32> to vector<1x1x1x32xf32>
    tpu.vector_store %arg3[%c0_56, %c0_57, %c1, %c0_58], %118 {strides = array<i32>} : memref<1x1x32x32xf32, #tpu.memory_space<vmem>>, vector<1x1x1x32xf32>,
    %119 = vector.extract_strided_slice %113 {offsets = [0, 1, 0], sizes = [1, 1, 32], strides = [1, 1, 1]} : vector<1x16x32xf32> to vector<1x1x32xf32>
    %120 = vector.shape_cast %119 : vector<1x1x32xf32> to vector<1x32xf32>
    %c0_59 = arith.constant 0 : index
    %c0_60 = arith.constant 0 : index
    %c3 = arith.constant 3 : index
    %c0_61 = arith.constant 0 : index
    %121 = vector.load %arg3[%c0_59, %c0_60, %c3, %c0_61] : memref<1x1x32x32xf32, #tpu.memory_space<vmem>>, vector<1x1x1x32xf32>
    %122 = vector.shape_cast %121 : vector<1x1x1x32xf32> to vector<1x32xf32>
    %123 = vector.shape_cast %120 : vector<1x32xf32> to vector<1x1x1x32xf32>
    tpu.vector_store %arg3[%c0_59, %c0_60, %c3, %c0_61], %123 {strides = array<i32>} : memref<1x1x32x32xf32, #tpu.memory_space<vmem>>, vector<1x1x1x32xf32>,
    %124 = vector.extract_strided_slice %113 {offsets = [0, 2, 0], sizes = [1, 1, 32], strides = [1, 1, 1]} : vector<1x16x32xf32> to vector<1x1x32xf32>
    %125 = vector.shape_cast %124 : vector<1x1x32xf32> to vector<1x32xf32>
    %c0_62 = arith.constant 0 : index
    %c0_63 = arith.constant 0 : index
    %c5 = arith.constant 5 : index
    %c0_64 = arith.constant 0 : index
    %126 = vector.load %arg3[%c0_62, %c0_63, %c5, %c0_64] : memref<1x1x32x32xf32, #tpu.memory_space<vmem>>, vector<1x1x1x32xf32>
    %127 = vector.shape_cast %126 : vector<1x1x1x32xf32> to vector<1x32xf32>
    %128 = vector.shape_cast %125 : vector<1x32xf32> to vector<1x1x1x32xf32>
    tpu.vector_store %arg3[%c0_62, %c0_63, %c5, %c0_64], %128 {strides = array<i32>} : memref<1x1x32x32xf32, #tpu.memory_space<vmem>>, vector<1x1x1x32xf32>,
    %129 = vector.extract_strided_slice %113 {offsets = [0, 3, 0], sizes = [1, 1, 32], strides = [1, 1, 1]} : vector<1x16x32xf32> to vector<1x1x32xf32>
    %130 = vector.shape_cast %129 : vector<1x1x32xf32> to vector<1x32xf32>
    %c0_65 = arith.constant 0 : index
    %c0_66 = arith.constant 0 : index
    %c7 = arith.constant 7 : index
    %c0_67 = arith.constant 0 : index
    %131 = vector.load %arg3[%c0_65, %c0_66, %c7, %c0_67] : memref<1x1x32x32xf32, #tpu.memory_space<vmem>>, vector<1x1x1x32xf32>
    %132 = vector.shape_cast %131 : vector<1x1x1x32xf32> to vector<1x32xf32>
    %133 = vector.shape_cast %130 : vector<1x32xf32> to vector<1x1x1x32xf32>
    tpu.vector_store %arg3[%c0_65, %c0_66, %c7, %c0_67], %133 {strides = array<i32>} : memref<1x1x32x32xf32, #tpu.memory_space<vmem>>, vector<1x1x1x32xf32>,
    %134 = vector.extract_strided_slice %113 {offsets = [0, 4, 0], sizes = [1, 1, 32], strides = [1, 1, 1]} : vector<1x16x32xf32> to vector<1x1x32xf32>
    %135 = vector.shape_cast %134 : vector<1x1x32xf32> to vector<1x32xf32>
    %c0_68 = arith.constant 0 : index
    %c0_69 = arith.constant 0 : index
    %c9 = arith.constant 9 : index
    %c0_70 = arith.constant 0 : index
    %136 = vector.load %arg3[%c0_68, %c0_69, %c9, %c0_70] : memref<1x1x32x32xf32, #tpu.memory_space<vmem>>, vector<1x1x1x32xf32>
    %137 = vector.shape_cast %136 : vector<1x1x1x32xf32> to vector<1x32xf32>
    %138 = vector.shape_cast %135 : vector<1x32xf32> to vector<1x1x1x32xf32>
    tpu.vector_store %arg3[%c0_68, %c0_69, %c9, %c0_70], %138 {strides = array<i32>} : memref<1x1x32x32xf32, #tpu.memory_space<vmem>>, vector<1x1x1x32xf32>,
    %139 = vector.extract_strided_slice %113 {offsets = [0, 5, 0], sizes = [1, 1, 32], strides = [1, 1, 1]} : vector<1x16x32xf32> to vector<1x1x32xf32>
    %140 = vector.shape_cast %139 : vector<1x1x32xf32> to vector<1x32xf32>
    %c0_71 = arith.constant 0 : index
    %c0_72 = arith.constant 0 : index
    %c11 = arith.constant 11 : index
    %c0_73 = arith.constant 0 : index
    %141 = vector.load %arg3[%c0_71, %c0_72, %c11, %c0_73] : memref<1x1x32x32xf32, #tpu.memory_space<vmem>>, vector<1x1x1x32xf32>
    %142 = vector.shape_cast %141 : vector<1x1x1x32xf32> to vector<1x32xf32>
    %143 = vector.shape_cast %140 : vector<1x32xf32> to vector<1x1x1x32xf32>
    tpu.vector_store %arg3[%c0_71, %c0_72, %c11, %c0_73], %143 {strides = array<i32>} : memref<1x1x32x32xf32, #tpu.memory_space<vmem>>, vector<1x1x1x32xf32>,
    %144 = vector.extract_strided_slice %113 {offsets = [0, 6, 0], sizes = [1, 1, 32], strides = [1, 1, 1]} : vector<1x16x32xf32> to vector<1x1x32xf32>
    %145 = vector.shape_cast %144 : vector<1x1x32xf32> to vector<1x32xf32>
    %c0_74 = arith.constant 0 : index
    %c0_75 = arith.constant 0 : index
    %c13 = arith.constant 13 : index
    %c0_76 = arith.constant 0 : index
    %146 = vector.load %arg3[%c0_74, %c0_75, %c13, %c0_76] : memref<1x1x32x32xf32, #tpu.memory_space<vmem>>, vector<1x1x1x32xf32>
    %147 = vector.shape_cast %146 : vector<1x1x1x32xf32> to vector<1x32xf32>
    %148 = vector.shape_cast %145 : vector<1x32xf32> to vector<1x1x1x32xf32>
    tpu.vector_store %arg3[%c0_74, %c0_75, %c13, %c0_76], %148 {strides = array<i32>} : memref<1x1x32x32xf32, #tpu.memory_space<vmem>>, vector<1x1x1x32xf32>,
    %149 = vector.extract_strided_slice %113 {offsets = [0, 7, 0], sizes = [1, 1, 32], strides = [1, 1, 1]} : vector<1x16x32xf32> to vector<1x1x32xf32>
    %150 = vector.shape_cast %149 : vector<1x1x32xf32> to vector<1x32xf32>
    %c0_77 = arith.constant 0 : index
    %c0_78 = arith.constant 0 : index
    %c15 = arith.constant 15 : index
    %c0_79 = arith.constant 0 : index
    %151 = vector.load %arg3[%c0_77, %c0_78, %c15, %c0_79] : memref<1x1x32x32xf32, #tpu.memory_space<vmem>>, vector<1x1x1x32xf32>
    %152 = vector.shape_cast %151 : vector<1x1x1x32xf32> to vector<1x32xf32>
    %153 = vector.shape_cast %150 : vector<1x32xf32> to vector<1x1x1x32xf32>
    tpu.vector_store %arg3[%c0_77, %c0_78, %c15, %c0_79], %153 {strides = array<i32>} : memref<1x1x32x32xf32, #tpu.memory_space<vmem>>, vector<1x1x1x32xf32>,
    %154 = vector.extract_strided_slice %113 {offsets = [0, 8, 0], sizes = [1, 1, 32], strides = [1, 1, 1]} : vector<1x16x32xf32> to vector<1x1x32xf32>
    %155 = vector.shape_cast %154 : vector<1x1x32xf32> to vector<1x32xf32>
    %c0_80 = arith.constant 0 : index
    %c0_81 = arith.constant 0 : index
    %c17 = arith.constant 17 : index
    %c0_82 = arith.constant 0 : index
    %156 = vector.load %arg3[%c0_80, %c0_81, %c17, %c0_82] : memref<1x1x32x32xf32, #tpu.memory_space<vmem>>, vector<1x1x1x32xf32>
    %157 = vector.shape_cast %156 : vector<1x1x1x32xf32> to vector<1x32xf32>
    %158 = vector.shape_cast %155 : vector<1x32xf32> to vector<1x1x1x32xf32>
    tpu.vector_store %arg3[%c0_80, %c0_81, %c17, %c0_82], %158 {strides = array<i32>} : memref<1x1x32x32xf32, #tpu.memory_space<vmem>>, vector<1x1x1x32xf32>,
    %159 = vector.extract_strided_slice %113 {offsets = [0, 9, 0], sizes = [1, 1, 32], strides = [1, 1, 1]} : vector<1x16x32xf32> to vector<1x1x32xf32>
    %160 = vector.shape_cast %159 : vector<1x1x32xf32> to vector<1x32xf32>
    %c0_83 = arith.constant 0 : index
    %c0_84 = arith.constant 0 : index
    %c19 = arith.constant 19 : index
    %c0_85 = arith.constant 0 : index
    %161 = vector.load %arg3[%c0_83, %c0_84, %c19, %c0_85] : memref<1x1x32x32xf32, #tpu.memory_space<vmem>>, vector<1x1x1x32xf32>
    %162 = vector.shape_cast %161 : vector<1x1x1x32xf32> to vector<1x32xf32>
    %163 = vector.shape_cast %160 : vector<1x32xf32> to vector<1x1x1x32xf32>
    tpu.vector_store %arg3[%c0_83, %c0_84, %c19, %c0_85], %163 {strides = array<i32>} : memref<1x1x32x32xf32, #tpu.memory_space<vmem>>, vector<1x1x1x32xf32>,
    %164 = vector.extract_strided_slice %113 {offsets = [0, 10, 0], sizes = [1, 1, 32], strides = [1, 1, 1]} : vector<1x16x32xf32> to vector<1x1x32xf32>
    %165 = vector.shape_cast %164 : vector<1x1x32xf32> to vector<1x32xf32>
    %c0_86 = arith.constant 0 : index
    %c0_87 = arith.constant 0 : index
    %c21 = arith.constant 21 : index
    %c0_88 = arith.constant 0 : index
    %166 = vector.load %arg3[%c0_86, %c0_87, %c21, %c0_88] : memref<1x1x32x32xf32, #tpu.memory_space<vmem>>, vector<1x1x1x32xf32>
    %167 = vector.shape_cast %166 : vector<1x1x1x32xf32> to vector<1x32xf32>
    %168 = vector.shape_cast %165 : vector<1x32xf32> to vector<1x1x1x32xf32>
    tpu.vector_store %arg3[%c0_86, %c0_87, %c21, %c0_88], %168 {strides = array<i32>} : memref<1x1x32x32xf32, #tpu.memory_space<vmem>>, vector<1x1x1x32xf32>,
    %169 = vector.extract_strided_slice %113 {offsets = [0, 11, 0], sizes = [1, 1, 32], strides = [1, 1, 1]} : vector<1x16x32xf32> to vector<1x1x32xf32>
    %170 = vector.shape_cast %169 : vector<1x1x32xf32> to vector<1x32xf32>
    %c0_89 = arith.constant 0 : index
    %c0_90 = arith.constant 0 : index
    %c23 = arith.constant 23 : index
    %c0_91 = arith.constant 0 : index
    %171 = vector.load %arg3[%c0_89, %c0_90, %c23, %c0_91] : memref<1x1x32x32xf32, #tpu.memory_space<vmem>>, vector<1x1x1x32xf32>
    %172 = vector.shape_cast %171 : vector<1x1x1x32xf32> to vector<1x32xf32>
    %173 = vector.shape_cast %170 : vector<1x32xf32> to vector<1x1x1x32xf32>
    tpu.vector_store %arg3[%c0_89, %c0_90, %c23, %c0_91], %173 {strides = array<i32>} : memref<1x1x32x32xf32, #tpu.memory_space<vmem>>, vector<1x1x1x32xf32>,
    %174 = vector.extract_strided_slice %113 {offsets = [0, 12, 0], sizes = [1, 1, 32], strides = [1, 1, 1]} : vector<1x16x32xf32> to vector<1x1x32xf32>
    %175 = vector.shape_cast %174 : vector<1x1x32xf32> to vector<1x32xf32>
    %c0_92 = arith.constant 0 : index
    %c0_93 = arith.constant 0 : index
    %c25 = arith.constant 25 : index
    %c0_94 = arith.constant 0 : index
    %176 = vector.load %arg3[%c0_92, %c0_93, %c25, %c0_94] : memref<1x1x32x32xf32, #tpu.memory_space<vmem>>, vector<1x1x1x32xf32>
    %177 = vector.shape_cast %176 : vector<1x1x1x32xf32> to vector<1x32xf32>
    %178 = vector.shape_cast %175 : vector<1x32xf32> to vector<1x1x1x32xf32>
    tpu.vector_store %arg3[%c0_92, %c0_93, %c25, %c0_94], %178 {strides = array<i32>} : memref<1x1x32x32xf32, #tpu.memory_space<vmem>>, vector<1x1x1x32xf32>,
    %179 = vector.extract_strided_slice %113 {offsets = [0, 13, 0], sizes = [1, 1, 32], strides = [1, 1, 1]} : vector<1x16x32xf32> to vector<1x1x32xf32>
    %180 = vector.shape_cast %179 : vector<1x1x32xf32> to vector<1x32xf32>
    %c0_95 = arith.constant 0 : index
    %c0_96 = arith.constant 0 : index
    %c27 = arith.constant 27 : index
    %c0_97 = arith.constant 0 : index
    %181 = vector.load %arg3[%c0_95, %c0_96, %c27, %c0_97] : memref<1x1x32x32xf32, #tpu.memory_space<vmem>>, vector<1x1x1x32xf32>
    %182 = vector.shape_cast %181 : vector<1x1x1x32xf32> to vector<1x32xf32>
    %183 = vector.shape_cast %180 : vector<1x32xf32> to vector<1x1x1x32xf32>
    tpu.vector_store %arg3[%c0_95, %c0_96, %c27, %c0_97], %183 {strides = array<i32>} : memref<1x1x32x32xf32, #tpu.memory_space<vmem>>, vector<1x1x1x32xf32>,
    %184 = vector.extract_strided_slice %113 {offsets = [0, 14, 0], sizes = [1, 1, 32], strides = [1, 1, 1]} : vector<1x16x32xf32> to vector<1x1x32xf32>
    %185 = vector.shape_cast %184 : vector<1x1x32xf32> to vector<1x32xf32>
    %c0_98 = arith.constant 0 : index
    %c0_99 = arith.constant 0 : index
    %c29 = arith.constant 29 : index
    %c0_100 = arith.constant 0 : index
    %186 = vector.load %arg3[%c0_98, %c0_99, %c29, %c0_100] : memref<1x1x32x32xf32, #tpu.memory_space<vmem>>, vector<1x1x1x32xf32>
    %187 = vector.shape_cast %186 : vector<1x1x1x32xf32> to vector<1x32xf32>
    %188 = vector.shape_cast %185 : vector<1x32xf32> to vector<1x1x1x32xf32>
    tpu.vector_store %arg3[%c0_98, %c0_99, %c29, %c0_100], %188 {strides = array<i32>} : memref<1x1x32x32xf32, #tpu.memory_space<vmem>>, vector<1x1x1x32xf32>,
    %189 = vector.extract_strided_slice %113 {offsets = [0, 15, 0], sizes = [1, 1, 32], strides = [1, 1, 1]} : vector<1x16x32xf32> to vector<1x1x32xf32>
    %190 = vector.shape_cast %189 : vector<1x1x32xf32> to vector<1x32xf32>
    %c0_101 = arith.constant 0 : index
    %c0_102 = arith.constant 0 : index
    %c31 = arith.constant 31 : index
    %c0_103 = arith.constant 0 : index
    %191 = vector.load %arg3[%c0_101, %c0_102, %c31, %c0_103] : memref<1x1x32x32xf32, #tpu.memory_space<vmem>>, vector<1x1x1x32xf32>
    %192 = vector.shape_cast %191 : vector<1x1x1x32xf32> to vector<1x32xf32>
    %193 = vector.shape_cast %190 : vector<1x32xf32> to vector<1x1x1x32xf32>
    tpu.vector_store %arg3[%c0_101, %c0_102, %c31, %c0_103], %193 {strides = array<i32>} : memref<1x1x32x32xf32, #tpu.memory_space<vmem>>, vector<1x1x1x32xf32>,
    return
  }
  func.func @transform_0(%arg0: i32, %arg1: i32) -> (i32, i32, i32, i32) {
    %c0_i32 = arith.constant 0 : i32
    %c0_i32_0 = arith.constant 0 : i32
    %c0_i32_1 = arith.constant 0 : i32
    return %arg0, %c0_i32, %arg1, %c0_i32_0 : i32, i32, i32, i32
  }
  func.func @transform_1(%arg0: i32, %arg1: i32) -> (i32, i32, i32, i32) {
    %c0_i32 = arith.constant 0 : i32
    %c0_i32_0 = arith.constant 0 : i32
    %c0_i32_1 = arith.constant 0 : i32
    return %arg0, %c0_i32, %arg1, %c0_i32_0 : i32, i32, i32, i32
  }
}

</mosaic_0001>

<llo_original>
// kernel: tpu_custom_call.1
$region0: #{tpu_custom_call.1}
  #allocation0 [shape = 'u32[]', space=smem, size = 0x4, offset = 0x4, fixed_abs, tag = 'smem constant byte address 0x4 - core index']
  #allocation1 [shape = 'u32[144,128]{1,0:T(1,128)}', space=vmem, size = 0x12000, scoped, tag = 'internal scratch']
  %s0 = inlined_call_operand.hbm [shape: f32[2,4,16,16], index: 0, kind: input, shape index: {}]
  %s1 = inlined_call_operand.hbm [shape: f32[2,1,32,32], index: 1, kind: output, shape index: {}]
  %s2 = sld [smem:[#allocation0]]
  $region41: #{tpu_custom_call.1} parent=0
    _
  %s4 = ssub.s32 1, %s2
  %s5 = scalar_select 0, %s4, %s2
  $region1: #{tpu_custom_call.1} parent=0
    #allocation2 [shape = 'u8[65536]{0}', space=vmem, size = 0x10000, scoped, tag = 'input window, operand 0']
    #allocation3 [shape = 's32[2]{0}', space=sflag, size = 0x8, scoped, tag = 'scoped memory for tpu_custom_call.1']
    #allocation4 [shape = 's32[2]{0}', space=sflag, size = 0x8, scoped, tag = 'scoped memory for tpu_custom_call.1']
    #allocation5 [shape = 'u8[32768]{0}', space=vmem, size = 0x8000, scoped, tag = 'output window, operand 0']
    %6 = vsyncpa [#allocation3], 0
    %s7 = scalar_lea.sflag [#allocation3], 1
    %8 = vsyncpa %s7, 0
    %9 = vsyncpa [#allocation4], 0
    %s10 = scalar_lea.sflag [#allocation4], 1
    %11 = vsyncpa %s10, 0
    loop: start=0, step=1, limit=4
    $region2: #{tpu_custom_call.1} parent=1 // loop_pre_header
      _
    $region3: #{tpu_custom_call.1} parent=1 // loop_header
      %s13 = sphi 0, %s17
      %p14 = scmp.ge.s32.totalorder %s13, 4
      %s20 = sphi 0, %s32
      %s21 = sphi 0, %s28
      %s22 = sphi 0, %s20
      %s23 = sphi 0, %s21
      %s24 = sphi 0, %s22
      %s25 = sphi 0, %s23
      %s37 = sphi 0, %s39
      %s40 = sphi 0, %s37
      %s41 = sphi 0, %s40
      %s57 = sphi 0, %s41
      %s65 = sphi 0, %s67
      %s68 = sphi 0, %s65
      %s69 = sphi 0, %s68
      %s85 = sphi 0, %s69
    $region4: #{tpu_custom_call.1} parent=1 // loop_header_branch
      %16 = sbr.rel (%p14) target = $region8
    $region5: #{tpu_custom_call.1} parent=1 // loop_body
      %s18 = ssub.s32 %s13, 1
      %s19 = ssub.s32 %s13, 2
      %s26 = sadd.s32 1, %s21
      %p27 = scmp.ge.s32.totalorder %s26, 1
      %s28 = scalar_select %p27, 0, %s26
      %s29 = sadd.s32 1, %s20
      %s30 = scalar_select %p27, %s29, %s20
      %p31 = scmp.ge.s32.totalorder %s30, 2
      %s32 = scalar_select %p31, 0, %s30
      %s33 = ssub.s32 %s20, %s32
      %s34 = ssub.s32 %s21, %s28
      %s35 = sor.u32 %s33, %s34
      %p36 = scmp.eq.s32.totalorder %s35, 0
      %s38 = sadd.s32 %s37, 1
      %s39 = scalar_select %p36, %s37, %s38
      %p42 = pneg %p36
      %p43 = scmp.eq.s32.totalorder %s13, 1
      %p44 = por %p42, %p43
      %p45 = scmp.ne.s32.totalorder %s37, %s40
      %p46 = scmp.eq.s32.totalorder %s13, 0
      %p47 = por %p45, %p46
      %p48 = scmp.ne.s32.totalorder %s37, %s40
      %p49 = scmp.eq.s32.totalorder %s18, 1
      %p50 = por %p48, %p49
      %p51 = scmp.ne.s32.totalorder %s40, %s41
      %p52 = scmp.eq.s32.totalorder %s18, 0
      %p53 = por %p51, %p52
      %p54 = scmp.ne.s32.totalorder %s40, %s41
      %p55 = scmp.eq.s32.totalorder %s19, 1
      %p56 = por %p54, %p55
      %p58 = scmp.ne.s32.totalorder %s41, %s57
      %p59 = scmp.eq.s32.totalorder %s19, 0
      %p60 = por %p58, %p59
      %s61 = ssub.s32 %s20, %s32
      %s62 = ssub.s32 %s21, %s28
      %s63 = sor.u32 %s61, %s62
      %p64 = scmp.eq.s32.totalorder %s63, 0
      %s66 = sadd.s32 %s65, 1
      %s67 = scalar_select %p64, %s65, %s66
      %p70 = pneg %p64
      %p71 = scmp.eq.s32.totalorder %s13, 1
      %p72 = por %p70, %p71
      %p73 = scmp.ne.s32.totalorder %s65, %s68
      %p74 = scmp.eq.s32.totalorder %s13, 0
      %p75 = por %p73, %p74
      %p76 = scmp.ne.s32.totalorder %s65, %s68
      %p77 = scmp.eq.s32.totalorder %s18, 1
      %p78 = por %p76, %p77
      %p79 = scmp.ne.s32.totalorder %s68, %s69
      %p80 = scmp.eq.s32.totalorder %s18, 0
      %p81 = por %p79, %p80
      %p82 = scmp.ne.s32.totalorder %s68, %s69
      %p83 = scmp.eq.s32.totalorder %s19, 1
      %p84 = por %p82, %p83
      %p86 = scmp.ne.s32.totalorder %s69, %s85
      %p87 = scmp.eq.s32.totalorder %s19, 0
      %p88 = por %p86, %p87
      %p89 = scmp.le.s32.totalorder 1, %s13
      %p90 = scmp.lt.s32.totalorder %s13, 3
      %p91 = pnand %p89, %p90
      %p92 = pneg %p91
      // Predicated region
      $region9: #{tpu_custom_call.1} parent=5 // pred_check
        _
      $region10: #{tpu_custom_call.1} parent=5 // pred_check_branch
        %94 = sbr.rel (%p91) target = $region12
      $region11: #{tpu_custom_call.1} parent=5 // pred_region
        %s95 = ssub.s32 %s13, 1
      $region12: #{tpu_custom_call.1} parent=5 // pred_fallthru
        _
      %p96 = scmp.lt.s32.totalorder %s13, 2
      // Predicated region
      $region13: #{tpu_custom_call.1} parent=5 // pred_check
        %p97 = pneg %p96
      $region14: #{tpu_custom_call.1} parent=5 // pred_check_branch
        %99 = sbr.rel (%p97) target = $region16
      $region15: #{tpu_custom_call.1} parent=5 // pred_region
        // Predicated region
        $region17: #{tpu_custom_call.1} parent=15 // pred_check
          %p100 = pneg %p47
        $region18: #{tpu_custom_call.1} parent=15 // pred_check_branch
          %102 = sbr.rel (%p100) target = $region20
        $region19: #{tpu_custom_call.1} parent=15 // pred_region
          %s103 = sand.u32 %s37, 1
          %s104 = scalar_lea.sflag [#allocation3], %s103
          %s105 = sand.u32 %s37, 1
          %s106 = smul.addr %s105, 64
          %s107 = scalar_lea.vmem [#allocation2], %s106
          %s108 = smul.u32 2, %s21
          %s110 = ssub.s32 1024, 1024
          %111 = vsyncadd %s104, %s110
          %s112 = smul.addr %s20, 8
          %s113 = sadd.s32 %s108, %s112
          %s114 = smul.addr %s113, 128
          %s115 = scalar_lea.hbm %s0, %s114
          %s116 = sshll.u32 %s107, 4
          %s117 = int_to_ptr.vmem [resolvable:$true] %s116
          %122 = dma.hbm_to_vmem [thread:$0]  %s115, 1024, %s117, %s104, 128, 128, 8
        $region20: #{tpu_custom_call.1} parent=15 // pred_fallthru
          _
      $region16: #{tpu_custom_call.1} parent=5 // pred_fallthru
        _
      %p123 = scmp.le.s32.totalorder 1, %s13
      %p124 = scmp.lt.s32.totalorder %s13, 3
      %p125 = pnand %p123, %p124
      %p126 = pneg %p125
      // Predicated region
      $region21: #{tpu_custom_call.1} parent=5 // pred_check
        _
      $region22: #{tpu_custom_call.1} parent=5 // pred_check_branch
        %128 = sbr.rel (%p125) target = $region24
      $region23: #{tpu_custom_call.1} parent=5 // pred_region
        %s129 = ssub.s32 %s13, 1
        %s130 = sand.u32 %s40, 1
        %s131 = scalar_lea.sflag [#allocation3], %s130
        %s132 = sand.u32 %s40, 1
        %s133 = smul.addr %s132, 64
        %s134 = scalar_lea.vmem [#allocation2], %s133
        // Predicated region
        $region25: #{tpu_custom_call.1} parent=23 // pred_check
          %p135 = pneg %p53
        $region26: #{tpu_custom_call.1} parent=23 // pred_check_branch
          %137 = sbr.rel (%p135) target = $region28
        $region27: #{tpu_custom_call.1} parent=23 // pred_region
          %138 = dma.done %s131, 1024
        $region28: #{tpu_custom_call.1} parent=23 // pred_fallthru
          _
        %s139 = sand.u32 %s40, 1
        %s140 = scalar_lea.sflag [#allocation3], %s139
        %s141 = sand.u32 %s40, 1
        %s142 = smul.addr %s141, 64
        %s143 = scalar_lea.vmem [#allocation2], %s142
        %p144 = pneg %p53
        %p145 = pneg %p50
        %p146 = pneg %p81
        %p147 = pneg %p78
        %s148 = sand.u32 %s68, 1
        %s149 = scalar_lea.sflag [#allocation4], %s148
        %s150 = sand.u32 %s68, 1
        %s151 = smul.addr %s150, 32
        %s152 = scalar_lea.vmem [#allocation5], %s151
        %s153 = smul.u32 2, %s23
        %s154 = smul.u32 4, %s23
        %v155 = vld [vmem:[%s134] sm:$0xff]
        %v156 = vld [vmem:[%s134 + $0x8] sm:$0xff]
        %v157 = vld [vmem:[%s134 + $0x10] sm:$0xff]
        %v158 = vld [vmem:[%s134 + $0x18] sm:$0xff]
        %v159 = vld [vmem:[%s134 + $0x20] sm:$0xff]
        %v160 = vld [vmem:[%s134 + $0x28] sm:$0xff]
        %v161 = vld [vmem:[%s134 + $0x30] sm:$0xff]
        %v162 = vld [vmem:[%s134 + $0x38] sm:$0xff]
        %v163 = vlaneseq
        %v164 = vshrl.u32 %v163, 7
        %v165 = vadd.s32 %v164, 8
        %v166 = vlaneseq
        %v167 = vand.u32 %v166, 127
        %v168 = vmul.u32 %v164, 2
        %v169 = vmul.u32 %v165, 2
        %vm170 = vcmp.eq.s32.totalorder %v167, %v168
        %vm171 = vcmp.eq.s32.totalorder %v167, %v169
        %v172 = vsel %vm170, 1, 0
        %v173 = vsel %vm171, 1, 0
        %v174 = vcvt.s32.f32 %v172
        %v175 = vcvt.s32.f32 %v173
        %v176 = vadd.s32 %v168, 1
        %v177 = vadd.s32 %v169, 1
        %vm178 = vcmp.eq.s32.totalorder %v167, %v176
        %vm179 = vcmp.eq.s32.totalorder %v167, %v177
        %v180 = vsel %vm178, 1, 0
        %v181 = vsel %vm179, 1, 0
        %v182 = vcvt.s32.f32 %v180
        %v183 = vcvt.s32.f32 %v181
        %vm184 = vcmask 130048
        %v186 = vsel %vm184, %v157, 0
        %v189 = vsel %vm184, %v158, 0
        %191 = vmatprep.subr.mxu0 0.0
        %192 = vmatpush1.msra.mxu0 %v182
        %193 = vmatprep.subr.mxu0 0.0
        %194 = vmatpush1.msra.mxu0 %v183
        %195 = vmatprep.subr.mxu0 0.0
        %196 = vmatpush1.msra.mxu0 0.0
        %197 = vmatprep.subr.mxu0 0.0
        %198 = vmatpush1.msra.mxu0 0.0
        %199 = vmatprep.subr.mxu0 0.0
        %200 = vmatpush1.msra.mxu0 0.0
        %201 = vmatprep.subr.mxu0 0.0
        %202 = vmatpush1.msra.mxu0 0.0
        %203 = vmatprep.subr.mxu0 0.0
        %204 = vmatpush1.msra.mxu0 0.0
        %205 = vmatprep.subr.mxu0 0.0
        %206 = vmatpush1.msra.mxu0 0.0
        %207 = vmatprep.subr.mxu0 0.0
        %208 = vmatpush1.msra.mxu0 0.0
        %209 = vmatprep.subr.mxu0 0.0
        %210 = vmatpush1.msra.mxu0 0.0
        %211 = vmatprep.subr.mxu0 0.0
        %212 = vmatpush1.msra.mxu0 0.0
        %213 = vmatprep.subr.mxu0 0.0
        %214 = vmatpush1.msra.mxu0 0.0
        %215 = vmatprep.subr.mxu0 0.0
        %216 = vmatpush1.msra.mxu0 0.0
        %217 = vmatprep.subr.mxu0 0.0
        %218 = vmatpush1.msra.mxu0 0.0
        %219 = vmatprep.subr.mxu0 0.0
        %220 = vmatpush1.msra.mxu0 0.0
        %221 = vmatprep.subr.mxu0 0.0
        %222 = vmatpush1.msra.mxu0 0.0
        %223 = vmatprep.subr.mxu0 0.0
        %224 = vmatpush1.msra.mxu0 0.0
        %225 = vmatprep.subr.mxu0 0.0
        %226 = vmatpush1.msra.mxu0 0.0
        %227 = vmatprep.subr.mxu0 0.0
        %228 = vmatpush1.msra.mxu0 0.0
        %229 = vmatprep.subr.mxu0 0.0
        %230 = vmatpush1.msra.mxu0 0.0
        %231 = vmatprep.subr.mxu0 0.0
        %232 = vmatpush1.msra.mxu0 0.0
        %233 = vmatprep.subr.mxu0 0.0
        %234 = vmatpush1.msra.mxu0 0.0
        %235 = vmatprep.subr.mxu0 0.0
        %236 = vmatpush1.msra.mxu0 0.0
        %237 = vmatprep.subr.mxu0 0.0
        %238 = vmatpush1.msra.mxu0 0.0
        %239 = vmatprep.subr.mxu0 0.0
        %240 = vmatpush1.msra.mxu0 0.0
        %241 = vmatprep.subr.mxu0 0.0
        %242 = vmatpush1.msra.mxu0 0.0
        %243 = vmatprep.subr.mxu0 0.0
        %244 = vmatpush1.msra.mxu0 0.0
        %245 = vmatprep.subr.mxu0 0.0
        %246 = vmatpush1.msra.mxu0 0.0
        %247 = vmatprep.subr.mxu0 0.0
        %248 = vmatpush1.msra.mxu0 0.0
        %249 = vmatprep.subr.mxu0 0.0
        %250 = vmatpush1.msra.mxu0 0.0
        %251 = vmatprep.subr.mxu0 0.0
        %252 = vmatpush1.msra.mxu0 0.0
        %253 = vmatprep.subr.mxu0 0.0
        %254 = vmatpush1.msra.mxu0 0.0
        %255 = vmatprep.mubr.f32.mxu0 0.0
        %256 = vmatmul.mubr.f32.gmra.mrb[0].mxu0 %v186
        %v257 = vpop.f32.mrb[0].mxu0
        %v258 = vadd.f32 0.0, %v257
        %v259 = vpop.f32.mrb[0].mxu0
        %260 = vmatprep.mubr.f32.mxu0 0.0
        %261 = vmatmul.mubr.f32.gmra.mrb[0].mxu0 %v189
        %v262 = vpop.f32.mrb[0].mxu0
        %v263 = vadd.f32 0.0, %v262
        %v264 = vpop.f32.mrb[0].mxu0
        %265 = vdwg.mxu0
        %v267 = vsel %vm184, %v155, 0
        %v270 = vsel %vm184, %v156, 0
        %272 = vmatprep.subr.mxu0 0.0
        %273 = vmatpush1.msra.mxu0 %v174
        %274 = vmatprep.subr.mxu0 0.0
        %275 = vmatpush1.msra.mxu0 %v175
        %276 = vmatprep.subr.mxu0 0.0
        %277 = vmatpush1.msra.mxu0 0.0
        %278 = vmatprep.subr.mxu0 0.0
        %279 = vmatpush1.msra.mxu0 0.0
        %280 = vmatprep.subr.mxu0 0.0
        %281 = vmatpush1.msra.mxu0 0.0
        %282 = vmatprep.subr.mxu0 0.0
        %283 = vmatpush1.msra.mxu0 0.0
        %284 = vmatprep.subr.mxu0 0.0
        %285 = vmatpush1.msra.mxu0 0.0
        %286 = vmatprep.subr.mxu0 0.0
        %287 = vmatpush1.msra.mxu0 0.0
        %288 = vmatprep.subr.mxu0 0.0
        %289 = vmatpush1.msra.mxu0 0.0
        %290 = vmatprep.subr.mxu0 0.0
        %291 = vmatpush1.msra.mxu0 0.0
        %292 = vmatprep.subr.mxu0 0.0
        %293 = vmatpush1.msra.mxu0 0.0
        %294 = vmatprep.subr.mxu0 0.0
        %295 = vmatpush1.msra.mxu0 0.0
        %296 = vmatprep.subr.mxu0 0.0
        %297 = vmatpush1.msra.mxu0 0.0
        %298 = vmatprep.subr.mxu0 0.0
        %299 = vmatpush1.msra.mxu0 0.0
        %300 = vmatprep.subr.mxu0 0.0
        %301 = vmatpush1.msra.mxu0 0.0
        %302 = vmatprep.subr.mxu0 0.0
        %303 = vmatpush1.msra.mxu0 0.0
        %304 = vmatprep.subr.mxu0 0.0
        %305 = vmatpush1.msra.mxu0 0.0
        %306 = vmatprep.subr.mxu0 0.0
        %307 = vmatpush1.msra.mxu0 0.0
        %308 = vmatprep.subr.mxu0 0.0
        %309 = vmatpush1.msra.mxu0 0.0
        %310 = vmatprep.subr.mxu0 0.0
        %311 = vmatpush1.msra.mxu0 0.0
        %312 = vmatprep.subr.mxu0 0.0
        %313 = vmatpush1.msra.mxu0 0.0
        %314 = vmatprep.subr.mxu0 0.0
        %315 = vmatpush1.msra.mxu0 0.0
        %316 = vmatprep.subr.mxu0 0.0
        %317 = vmatpush1.msra.mxu0 0.0
        %318 = vmatprep.subr.mxu0 0.0
        %319 = vmatpush1.msra.mxu0 0.0
        %320 = vmatprep.subr.mxu0 0.0
        %321 = vmatpush1.msra.mxu0 0.0
        %322 = vmatprep.subr.mxu0 0.0
        %323 = vmatpush1.msra.mxu0 0.0
        %324 = vmatprep.subr.mxu0 0.0
        %325 = vmatpush1.msra.mxu0 0.0
        %326 = vmatprep.subr.mxu0 0.0
        %327 = vmatpush1.msra.mxu0 0.0
        %328 = vmatprep.subr.mxu0 0.0
        %329 = vmatpush1.msra.mxu0 0.0
        %330 = vmatprep.subr.mxu0 0.0
        %331 = vmatpush1.msra.mxu0 0.0
        %332 = vmatprep.subr.mxu0 0.0
        %333 = vmatpush1.msra.mxu0 0.0
        %334 = vmatprep.subr.mxu0 0.0
        %335 = vmatpush1.msra.mxu0 0.0
        %336 = vmatprep.mubr.f32.mxu0 0.0
        %337 = vmatmul.mubr.f32.gmra.mrb[0].mxu0 %v267
        %v338 = vpop.f32.mrb[0].mxu0
        %v339 = vadd.f32 %v258, %v338
        %v340 = vpop.f32.mrb[0].mxu0
        %341 = vmatprep.mubr.f32.mxu0 0.0
        %342 = vmatmul.mubr.f32.gmra.mrb[0].mxu0 %v270
        %v343 = vpop.f32.mrb[0].mxu0
        %v344 = vadd.f32 %v263, %v343
        %v345 = vpop.f32.mrb[0].mxu0
        %346 = vdwg.mxu0
        %vm347 = vcmask 253952
        %348 = vst.msk [vmem:[%s152] sm:$0x1] %vm347, %v339
        %vm349 = vcmask 254977
        %350 = vst.msk [vmem:[%s152 + $0x1] sm:$0x2] %vm349, %v339
        %vm351 = vcmask 256002
        %352 = vst.msk [vmem:[%s152 + $0x2] sm:$0x4] %vm351, %v339
        %vm353 = vcmask 257027
        %354 = vst.msk [vmem:[%s152 + $0x3] sm:$0x8] %vm353, %v339
        %vm355 = vcmask 258052
        %356 = vst.msk [vmem:[%s152 + $0x4] sm:$0x10] %vm355, %v339
        %vm357 = vcmask 259077
        %358 = vst.msk [vmem:[%s152 + $0x5] sm:$0x20] %vm357, %v339
        %vm359 = vcmask 260102
        %360 = vst.msk [vmem:[%s152 + $0x6] sm:$0x40] %vm359, %v339
        %vm361 = vcmask 261127
        %362 = vst.msk [vmem:[%s152 + $0x7] sm:$0x80] %vm361, %v339
        %363 = vst.msk [vmem:[%s152 + $0x10] sm:$0x1] %vm347, %v344
        %364 = vst.msk [vmem:[%s152 + $0x11] sm:$0x2] %vm349, %v344
        %365 = vst.msk [vmem:[%s152 + $0x12] sm:$0x4] %vm351, %v344
        %366 = vst.msk [vmem:[%s152 + $0x13] sm:$0x8] %vm353, %v344
        %367 = vst.msk [vmem:[%s152 + $0x14] sm:$0x10] %vm355, %v344
        %368 = vst.msk [vmem:[%s152 + $0x15] sm:$0x20] %vm357, %v344
        %369 = vst.msk [vmem:[%s152 + $0x16] sm:$0x40] %vm359, %v344
        %370 = vst.msk [vmem:[%s152 + $0x17] sm:$0x80] %vm361, %v344
        %v372 = vsel %vm184, %v161, 0
        %v375 = vsel %vm184, %v162, 0
        %377 = vmatprep.subr.mxu0 0.0
        %378 = vmatpush1.msra.mxu0 %v182
        %379 = vmatprep.subr.mxu0 0.0
        %380 = vmatpush1.msra.mxu0 %v183
        %381 = vmatprep.subr.mxu0 0.0
        %382 = vmatpush1.msra.mxu0 0.0
        %383 = vmatprep.subr.mxu0 0.0
        %384 = vmatpush1.msra.mxu0 0.0
        %385 = vmatprep.subr.mxu0 0.0
        %386 = vmatpush1.msra.mxu0 0.0
        %387 = vmatprep.subr.mxu0 0.0
        %388 = vmatpush1.msra.mxu0 0.0
        %389 = vmatprep.subr.mxu0 0.0
        %390 = vmatpush1.msra.mxu0 0.0
        %391 = vmatprep.subr.mxu0 0.0
        %392 = vmatpush1.msra.mxu0 0.0
        %393 = vmatprep.subr.mxu0 0.0
        %394 = vmatpush1.msra.mxu0 0.0
        %395 = vmatprep.subr.mxu0 0.0
        %396 = vmatpush1.msra.mxu0 0.0
        %397 = vmatprep.subr.mxu0 0.0
        %398 = vmatpush1.msra.mxu0 0.0
        %399 = vmatprep.subr.mxu0 0.0
        %400 = vmatpush1.msra.mxu0 0.0
        %401 = vmatprep.subr.mxu0 0.0
        %402 = vmatpush1.msra.mxu0 0.0
        %403 = vmatprep.subr.mxu0 0.0
        %404 = vmatpush1.msra.mxu0 0.0
        %405 = vmatprep.subr.mxu0 0.0
        %406 = vmatpush1.msra.mxu0 0.0
        %407 = vmatprep.subr.mxu0 0.0
        %408 = vmatpush1.msra.mxu0 0.0
        %409 = vmatprep.subr.mxu0 0.0
        %410 = vmatpush1.msra.mxu0 0.0
        %411 = vmatprep.subr.mxu0 0.0
        %412 = vmatpush1.msra.mxu0 0.0
        %413 = vmatprep.subr.mxu0 0.0
        %414 = vmatpush1.msra.mxu0 0.0
        %415 = vmatprep.subr.mxu0 0.0
        %416 = vmatpush1.msra.mxu0 0.0
        %417 = vmatprep.subr.mxu0 0.0
        %418 = vmatpush1.msra.mxu0 0.0
        %419 = vmatprep.subr.mxu0 0.0
        %420 = vmatpush1.msra.mxu0 0.0
        %421 = vmatprep.subr.mxu0 0.0
        %422 = vmatpush1.msra.mxu0 0.0
        %423 = vmatprep.subr.mxu0 0.0
        %424 = vmatpush1.msra.mxu0 0.0
        %425 = vmatprep.subr.mxu0 0.0
        %426 = vmatpush1.msra.mxu0 0.0
        %427 = vmatprep.subr.mxu0 0.0
        %428 = vmatpush1.msra.mxu0 0.0
        %429 = vmatprep.subr.mxu0 0.0
        %430 = vmatpush1.msra.mxu0 0.0
        %431 = vmatprep.subr.mxu0 0.0
        %432 = vmatpush1.msra.mxu0 0.0
        %433 = vmatprep.subr.mxu0 0.0
        %434 = vmatpush1.msra.mxu0 0.0
        %435 = vmatprep.subr.mxu0 0.0
        %436 = vmatpush1.msra.mxu0 0.0
        %437 = vmatprep.subr.mxu0 0.0
        %438 = vmatpush1.msra.mxu0 0.0
        %439 = vmatprep.subr.mxu0 0.0
        %440 = vmatpush1.msra.mxu0 0.0
        %441 = vmatprep.mubr.f32.mxu0 0.0
        %442 = vmatmul.mubr.f32.gmra.mrb[0].mxu0 %v372
        %v443 = vpop.f32.mrb[0].mxu0
        %v444 = vadd.f32 0.0, %v443
        %v445 = vpop.f32.mrb[0].mxu0
        %446 = vmatprep.mubr.f32.mxu0 0.0
        %447 = vmatmul.mubr.f32.gmra.mrb[0].mxu0 %v375
        %v448 = vpop.f32.mrb[0].mxu0
        %v449 = vadd.f32 0.0, %v448
        %v450 = vpop.f32.mrb[0].mxu0
        %451 = vdwg.mxu0
        %v453 = vsel %vm184, %v159, 0
        %v456 = vsel %vm184, %v160, 0
        %458 = vmatprep.subr.mxu0 0.0
        %459 = vmatpush1.msra.mxu0 %v174
        %460 = vmatprep.subr.mxu0 0.0
        %461 = vmatpush1.msra.mxu0 %v175
        %462 = vmatprep.subr.mxu0 0.0
        %463 = vmatpush1.msra.mxu0 0.0
        %464 = vmatprep.subr.mxu0 0.0
        %465 = vmatpush1.msra.mxu0 0.0
        %466 = vmatprep.subr.mxu0 0.0
        %467 = vmatpush1.msra.mxu0 0.0
        %468 = vmatprep.subr.mxu0 0.0
        %469 = vmatpush1.msra.mxu0 0.0
        %470 = vmatprep.subr.mxu0 0.0
        %471 = vmatpush1.msra.mxu0 0.0
        %472 = vmatprep.subr.mxu0 0.0
        %473 = vmatpush1.msra.mxu0 0.0
        %474 = vmatprep.subr.mxu0 0.0
        %475 = vmatpush1.msra.mxu0 0.0
        %476 = vmatprep.subr.mxu0 0.0
        %477 = vmatpush1.msra.mxu0 0.0
        %478 = vmatprep.subr.mxu0 0.0
        %479 = vmatpush1.msra.mxu0 0.0
        %480 = vmatprep.subr.mxu0 0.0
        %481 = vmatpush1.msra.mxu0 0.0
        %482 = vmatprep.subr.mxu0 0.0
        %483 = vmatpush1.msra.mxu0 0.0
        %484 = vmatprep.subr.mxu0 0.0
        %485 = vmatpush1.msra.mxu0 0.0
        %486 = vmatprep.subr.mxu0 0.0
        %487 = vmatpush1.msra.mxu0 0.0
        %488 = vmatprep.subr.mxu0 0.0
        %489 = vmatpush1.msra.mxu0 0.0
        %490 = vmatprep.subr.mxu0 0.0
        %491 = vmatpush1.msra.mxu0 0.0
        %492 = vmatprep.subr.mxu0 0.0
        %493 = vmatpush1.msra.mxu0 0.0
        %494 = vmatprep.subr.mxu0 0.0
        %495 = vmatpush1.msra.mxu0 0.0
        %496 = vmatprep.subr.mxu0 0.0
        %497 = vmatpush1.msra.mxu0 0.0
        %498 = vmatprep.subr.mxu0 0.0
        %499 = vmatpush1.msra.mxu0 0.0
        %500 = vmatprep.subr.mxu0 0.0
        %501 = vmatpush1.msra.mxu0 0.0
        %502 = vmatprep.subr.mxu0 0.0
        %503 = vmatpush1.msra.mxu0 0.0
        %504 = vmatprep.subr.mxu0 0.0
        %505 = vmatpush1.msra.mxu0 0.0
        %506 = vmatprep.subr.mxu0 0.0
        %507 = vmatpush1.msra.mxu0 0.0
        %508 = vmatprep.subr.mxu0 0.0
        %509 = vmatpush1.msra.mxu0 0.0
        %510 = vmatprep.subr.mxu0 0.0
        %511 = vmatpush1.msra.mxu0 0.0
        %512 = vmatprep.subr.mxu0 0.0
        %513 = vmatpush1.msra.mxu0 0.0
        %514 = vmatprep.subr.mxu0 0.0
        %515 = vmatpush1.msra.mxu0 0.0
        %516 = vmatprep.subr.mxu0 0.0
        %517 = vmatpush1.msra.mxu0 0.0
        %518 = vmatprep.subr.mxu0 0.0
        %519 = vmatpush1.msra.mxu0 0.0
        %520 = vmatprep.subr.mxu0 0.0
        %521 = vmatpush1.msra.mxu0 0.0
        %522 = vmatprep.mubr.f32.mxu0 0.0
        %523 = vmatmul.mubr.f32.gmra.mrb[0].mxu0 %v453
        %v524 = vpop.f32.mrb[0].mxu0
        %v525 = vadd.f32 %v444, %v524
        %v526 = vpop.f32.mrb[0].mxu0
        %527 = vmatprep.mubr.f32.mxu0 0.0
        %528 = vmatmul.mubr.f32.gmra.mrb[0].mxu0 %v456
        %v529 = vpop.f32.mrb[0].mxu0
        %v530 = vadd.f32 %v449, %v529
        %v531 = vpop.f32.mrb[0].mxu0
        %532 = vdwg.mxu0
        %533 = vst.msk [vmem:[%s152 + $0x1] sm:$0x1] %vm347, %v525
        %534 = vst.msk [vmem:[%s152 + $0x2] sm:$0x2] %vm349, %v525
        %535 = vst.msk [vmem:[%s152 + $0x3] sm:$0x4] %vm351, %v525
        %536 = vst.msk [vmem:[%s152 + $0x4] sm:$0x8] %vm353, %v525
        %537 = vst.msk [vmem:[%s152 + $0x5] sm:$0x10] %vm355, %v525
        %538 = vst.msk [vmem:[%s152 + $0x6] sm:$0x20] %vm357, %v525
        %539 = vst.msk [vmem:[%s152 + $0x7] sm:$0x40] %vm359, %v525
        %540 = vst.msk [vmem:[%s152 + $0x8] sm:$0x80] %vm361, %v525
        %541 = vst.msk [vmem:[%s152 + $0x11] sm:$0x1] %vm347, %v530
        %542 = vst.msk [vmem:[%s152 + $0x12] sm:$0x2] %vm349, %v530
        %543 = vst.msk [vmem:[%s152 + $0x13] sm:$0x4] %vm351, %v530
        %544 = vst.msk [vmem:[%s152 + $0x14] sm:$0x8] %vm353, %v530
        %545 = vst.msk [vmem:[%s152 + $0x15] sm:$0x10] %vm355, %v530
        %546 = vst.msk [vmem:[%s152 + $0x16] sm:$0x20] %vm357, %v530
        %547 = vst.msk [vmem:[%s152 + $0x17] sm:$0x40] %vm359, %v530
        %548 = vst.msk [vmem:[%s152 + $0x18] sm:$0x80] %vm361, %v530
        %s549 = sand.u32 %s68, 1
        %s550 = scalar_lea.sflag [#allocation4], %s549
        %s551 = sand.u32 %s68, 1
        %s552 = smul.addr %s551, 32
        %s553 = scalar_lea.vmem [#allocation5], %s552
        // Predicated region
        $region29: #{tpu_custom_call.1} parent=23 // pred_check
          %p554 = pneg %p78
        $region30: #{tpu_custom_call.1} parent=23 // pred_check_branch
          %556 = sbr.rel (%p554) target = $region32
        $region31: #{tpu_custom_call.1} parent=23 // pred_region
          %s557 = smul.u32 4, %s23
          %s559 = ssub.s32 512, 512
          %560 = vsyncadd %s550, %s559
          %s561 = smul.addr %s22, 4
          %s562 = sadd.s32 %s557, %s561
          %s563 = smul.addr %s562, 128
          %s564 = scalar_lea.hbm %s1, %s563
          %s565 = sshll.u32 %s553, 4
          %s566 = int_to_ptr.vmem [resolvable:$true] %s565
          %571 = dma.vmem_to_hbm [thread:$0]  %s566, 512, %s564, %s550, 128, 128, 8
        $region32: #{tpu_custom_call.1} parent=23 // pred_fallthru
          _
      $region24: #{tpu_custom_call.1} parent=5 // pred_fallthru
        _
      %p572 = scmp.le.s32.totalorder 2, %s13
      // Predicated region
      $region33: #{tpu_custom_call.1} parent=5 // pred_check
        %p573 = pneg %p572
      $region34: #{tpu_custom_call.1} parent=5 // pred_check_branch
        %575 = sbr.rel (%p573) target = $region36
      $region35: #{tpu_custom_call.1} parent=5 // pred_region
        %s576 = ssub.s32 %s13, 2
        // Predicated region
        $region37: #{tpu_custom_call.1} parent=35 // pred_check
          %p577 = pneg %p84
        $region38: #{tpu_custom_call.1} parent=35 // pred_check_branch
          %579 = sbr.rel (%p577) target = $region40
        $region39: #{tpu_custom_call.1} parent=35 // pred_region
          %s580 = sand.u32 %s69, 1
          %s581 = scalar_lea.sflag [#allocation4], %s580
          %s582 = sand.u32 %s69, 1
          %s583 = smul.addr %s582, 32
          %s584 = scalar_lea.vmem [#allocation5], %s583
          %585 = dma.done %s581, 512
        $region40: #{tpu_custom_call.1} parent=35 // pred_fallthru
          _
      $region36: #{tpu_custom_call.1} parent=5 // pred_fallthru
        _
    $region6: #{tpu_custom_call.1} parent=1 // loop_footer
      %s17 = sadd.s32 1, %s13
    $region7: #{tpu_custom_call.1} parent=1 // loop_footer_branch
      %12 = sbr.rel target = $region3
    $region8: #{tpu_custom_call.1} parent=1 // loop_exit
      _
    %586 = vsyncpa [#allocation3], 1
    %s587 = scalar_lea.sflag [#allocation3], 1
    %588 = vsyncpa %s587, 1
    %589 = vsyncpa [#allocation4], 1
    %s590 = scalar_lea.sflag [#allocation4], 1
    %591 = vsyncpa %s590, 1

</llo_original>
